<compile_context>
chip_gen: v6e
topology: v6e:2x2x1
jax: 0.10.0
libtpu: 0.0.40
codegen_flags: <defaults>
</compile_context>

<pallas_src>
import functools

import jax
import jax.numpy as jnp
from jax import lax
from jax.experimental import pallas as pl
from jax.experimental.pallas import tpu as pltpu


def _rebert_embedding_kernel(ids_ref, table_ref, gamma_ref, beta_ref, out_ref,
                             gbuf_ref, sem_ref, *, block_rows, eps):
    # ids_ref:   (N_pad,)          int32   SMEM (scalar prefetch)
    # table_ref: (V, D)            float32 HBM  (memory_space=pl.ANY)
    # gamma_ref: (1, D)            float32 VMEM (grid-invariant, loaded once per step)
    # beta_ref:  (1, D)            float32 VMEM
    # out_ref:   (block_rows, D)   float32 VMEM (pipelined writeback)
    # gbuf_ref:  (block_rows, D)   float32 VMEM scratch (gathered embedding rows)
    # sem_ref:   DMA semaphore
    i = pl.program_id(0)
    base = i * block_rows

    # --- row gather: issue one HBM->VMEM DMA per token of this tile, then drain ---
    def issue(r, carry):
        tok = ids_ref[base + r]
        pltpu.make_async_copy(table_ref.at[tok], gbuf_ref.at[r], sem_ref).start()
        return carry

    lax.fori_loop(0, block_rows, issue, 0)

    def drain(r, carry):
        tok = ids_ref[base + r]
        pltpu.make_async_copy(table_ref.at[tok], gbuf_ref.at[r], sem_ref).wait()
        return carry

    lax.fori_loop(0, block_rows, drain, 0)

    x = gbuf_ref[...]                                   # (block_rows, D) f32
    d = x.shape[-1]
    inv_d = 1.0 / d

    # --- fused LayerNorm stats (single pass: sum and sum-of-squares) ---
    s1 = jnp.sum(x, axis=-1, keepdims=True)             # (block_rows, 1)
    s2 = jnp.sum(x * x, axis=-1, keepdims=True)         # (block_rows, 1)
    mean = s1 * inv_d
    var = s2 * inv_d - mean * mean                      # biased variance, eps inside rsqrt
    inv = lax.rsqrt(var + eps)

    out = (x - mean) * inv * gamma_ref[...] + beta_ref[...]   # broadcast (1, D)

    # --- dropout: eval mode => identity ---
    out_ref[...] = out.astype(out_ref.dtype)


def rebert_embedding(seq, table, gamma, beta, *, eps=1e-12, block_rows=128):
    """seq: (B, S) int32 token ids. table: (V, D) f32. Returns (B, S, D) float32."""
    b, s = seq.shape
    v, d = table.shape
    n = b * s

    n_blocks = pl.cdiv(n, block_rows)
    n_pad = n_blocks * block_rows

    ids = seq.reshape(-1).astype(jnp.int32)
    if n_pad != n:
        # pad with the padding index 0 (its table row is zero; padded rows are discarded).
        ids = jnp.concatenate([ids, jnp.zeros((n_pad - n,), jnp.int32)])

    kernel = functools.partial(_rebert_embedding_kernel,
                               block_rows=block_rows, eps=eps)

    out = pl.pallas_call(
        kernel,
        out_shape=jax.ShapeDtypeStruct((n_pad, d), jnp.float32),
        grid_spec=pltpu.PrefetchScalarGridSpec(
            num_scalar_prefetch=1,                       # ids -> SMEM
            grid=(n_blocks,),
            in_specs=[
                pl.BlockSpec(memory_space=pl.ANY),       # embedding table stays in HBM
                pl.BlockSpec((1, d), lambda i, ids: (0, 0)),   # layernorm gamma (resident)
                pl.BlockSpec((1, d), lambda i, ids: (0, 0)),   # layernorm beta  (resident)
            ],
            out_specs=pl.BlockSpec((block_rows, d), lambda i, ids: (i, 0)),
            scratch_shapes=[
                pltpu.VMEM((block_rows, d), jnp.float32),      # gathered rows
                pltpu.SemaphoreType.DMA,                       # gather completion
            ],
        ),
        compiler_params=pltpu.CompilerParams(
            dimension_semantics=("parallel",)),          # megacore sharding on v7x
    )(ids, table, gamma, beta)

    return out[:n].reshape(b, s, d)


def make_params(key, vocab_size, d_model, vocab_pad=0):
    # Deterministic synthetic parameters matching nn.Embedding / nn.LayerNorm shapes.
    (k_emb,) = jax.random.split(key, 1)
    table = jax.random.normal(k_emb, (vocab_size, d_model), dtype=jnp.float32)
    # nn.Embedding(padding_idx=vocab_pad) zeroes that row.
    table = table.at[vocab_pad].set(0.0)
    gamma = jnp.ones((1, d_model), dtype=jnp.float32)    # LayerNorm weight init = 1
    beta = jnp.zeros((1, d_model), dtype=jnp.float32)    # LayerNorm bias init = 0
    return table, gamma, beta


if __name__ == "__main__":
    vocab_size = 512
    d_model = 128          # lane-dense output (multiple of 128)
    batch, seqlen = 2, 200  # N = 400 -> padded to 512 -> 4 token tiles of 128

    key = jax.random.PRNGKey(0)
    k_ids, k_params = jax.random.split(key)

    seq = jax.random.randint(k_ids, (batch, seqlen), 0, vocab_size, dtype=jnp.int32)
    table, gamma, beta = make_params(k_params, vocab_size, d_model, vocab_pad=0)

    out = rebert_embedding(seq, table, gamma, beta, eps=1e-12, block_rows=128)
    out = jax.block_until_ready(out)

    # Sanity check against a pure-JAX reference of the same forward (eval-mode dropout).
    emb_ref = table[seq]                                            # (B, S, D)
    mean = emb_ref.mean(-1, keepdims=True)
    var = ((emb_ref - mean) ** 2).mean(-1, keepdims=True)
    ref = (emb_ref - mean) / jnp.sqrt(var + 1e-12) * gamma[0] + beta[0]

    assert out.shape == (batch, seqlen, d_model)
    assert jnp.allclose(out, ref, atol=1e-4, rtol=1e-4), float(jnp.abs(out - ref).max())

    print("KERNEL_OK")
</pallas_src>

<mosaic_0001>
module attributes {stable_mosaic.version = 11 : i64} {
  func.func @_rebert_embedding_kernel(%arg0: i32, %arg1: memref<512xi32, #tpu.memory_space<smem>>, %arg2: memref<512x128xf32, #tpu.memory_space<any>>, %arg3: memref<1x128xf32, #tpu.memory_space<vmem>>, %arg4: memref<1x128xf32, #tpu.memory_space<vmem>>, %arg5: memref<128x128xf32, #tpu.memory_space<vmem>>, %arg6: memref<128x128xf32, #tpu.memory_space<vmem>>, %arg7: memref<!tpu.dma_semaphore, #tpu.memory_space<semaphore_mem>>) attributes {dimension_semantics = [#tpu.dimension_semantics<parallel>], iteration_bounds = array<i64: 4>, scalar_prefetch = 1 : i64, scratch_operands = 2 : i64, tpu.core_type = #tpu.core_type<tc>, window_params = [{}, {pipeline_mode = #tpu.pipeline_mode<synchronous>, transform_indices = @transform_1, window_bounds = array<i64: 1, 128>}, {pipeline_mode = #tpu.pipeline_mode<synchronous>, transform_indices = @transform_2, window_bounds = array<i64: 1, 128>}, {transform_indices = @transform_3, window_bounds = array<i64: 128, 128>}]} {
    %c128_i32 = arith.constant 128 : i32
    %0 = arith.muli %arg0, %c128_i32 : i32
    %c0_i32 = arith.constant 0 : i32
    %c128_i32_0 = arith.constant 128 : i32
    %1 = arith.addi %c0_i32, %c128_i32_0 : i32
    %c1_i32 = arith.constant 1 : i32
    scf.for %arg8 = %c0_i32 to %1 step %c1_i32  : i32 {
      %29 = arith.addi %0, %arg8 : i32
      %30 = arith.index_cast %29 : i32 to index
      %31 = memref.load %arg1[%30] : memref<512xi32, #tpu.memory_space<smem>>
      %c0_i32_17 = arith.constant 0 : i32
      %32 = tpu.memref_slice %arg2[%31, %c0_i32_17] : memref<512x128xf32, #tpu.memory_space<any>> -> memref<1x128xf32, #tpu.memory_space<any>>
      %33 = tpu.memref_squeeze %32 : memref<1x128xf32, #tpu.memory_space<any>> -> memref<128xf32, #tpu.memory_space<any>>
      %c0_i32_18 = arith.constant 0 : i32
      %34 = tpu.memref_slice %arg6[%arg8, %c0_i32_18] : memref<128x128xf32, #tpu.memory_space<vmem>> -> memref<1x128xf32, #tpu.memory_space<vmem>>
      %35 = tpu.memref_squeeze %34 : memref<1x128xf32, #tpu.memory_space<vmem>> -> memref<128xf32, #tpu.memory_space<vmem>>
      tpu.enqueue_dma source(%33 : memref<128xf32, #tpu.memory_space<any>>) target(%35 : memref<128xf32, #tpu.memory_space<vmem>>) target_semaphore(%arg7 : memref<!tpu.dma_semaphore, #tpu.memory_space<semaphore_mem>>)
    }
    %c128_i32_1 = arith.constant 128 : i32
    %c0_i32_2 = arith.constant 0 : i32
    %c128_i32_3 = arith.constant 128 : i32
    %2 = arith.addi %c0_i32_2, %c128_i32_3 : i32
    %c1_i32_4 = arith.constant 1 : i32
    scf.for %arg8 = %c0_i32_2 to %2 step %c1_i32_4  : i32 {
      %29 = arith.addi %0, %arg8 : i32
      %30 = arith.index_cast %29 : i32 to index
      %31 = memref.load %arg1[%30] : memref<512xi32, #tpu.memory_space<smem>>
      %c0_i32_17 = arith.constant 0 : i32
      %32 = tpu.memref_slice %arg2[%31, %c0_i32_17] : memref<512x128xf32, #tpu.memory_space<any>> -> memref<1x128xf32, #tpu.memory_space<any>>
      %33 = tpu.memref_squeeze %32 : memref<1x128xf32, #tpu.memory_space<any>> -> memref<128xf32, #tpu.memory_space<any>>
      %c0_i32_18 = arith.constant 0 : i32
      %34 = tpu.memref_slice %arg6[%arg8, %c0_i32_18] : memref<128x128xf32, #tpu.memory_space<vmem>> -> memref<1x128xf32, #tpu.memory_space<vmem>>
      %35 = tpu.memref_squeeze %34 : memref<1x128xf32, #tpu.memory_space<vmem>> -> memref<128xf32, #tpu.memory_space<vmem>>
      tpu.wait_dma2 semaphore(%arg7 : memref<!tpu.dma_semaphore, #tpu.memory_space<semaphore_mem>>) src(%33 : memref<128xf32, #tpu.memory_space<any>>) dst(%35 : memref<128xf32, #tpu.memory_space<vmem>>)
    }
    %c128_i32_5 = arith.constant 128 : i32
    %c0 = arith.constant 0 : index
    %c0_6 = arith.constant 0 : index
    %3 = vector.load %arg6[%c0, %c0_6] : memref<128x128xf32, #tpu.memory_space<vmem>>, vector<128x128xf32>
    %cst = arith.constant dense<0.000000e+00> : vector<128xf32>
    %4 = vector.multi_reduction <add>, %3, %cst [1] : vector<128x128xf32> to vector<128xf32>
    %5 = vector.shape_cast %4 : vector<128xf32> to vector<128x1xf32>
    %6 = arith.mulf %3, %3 : vector<128x128xf32>
    %cst_7 = arith.constant dense<0.000000e+00> : vector<128xf32>
    %7 = vector.multi_reduction <add>, %6, %cst_7 [1] : vector<128x128xf32> to vector<128xf32>
    %8 = vector.shape_cast %7 : vector<128xf32> to vector<128x1xf32>
    %cst_8 = arith.constant 7.812500e-03 : f32
    %9 = vector.broadcast %cst_8 : f32 to vector<128x1xf32>
    %10 = arith.mulf %5, %9 : vector<128x1xf32>
    %cst_9 = arith.constant 7.812500e-03 : f32
    %11 = vector.broadcast %cst_9 : f32 to vector<128x1xf32>
    %12 = arith.mulf %8, %11 : vector<128x1xf32>
    %13 = arith.mulf %10, %10 : vector<128x1xf32>
    %14 = arith.subf %12, %13 : vector<128x1xf32>
    %cst_10 = arith.constant 9.99999996E-13 : f32
    %15 = vector.broadcast %cst_10 : f32 to vector<128x1xf32>
    %16 = arith.addf %14, %15 : vector<128x1xf32>
    %17 = math.rsqrt %16 : vector<128x1xf32>
    %18 = vector.broadcast %10 : vector<128x1xf32> to vector<128x128xf32>
    %19 = arith.subf %3, %18 : vector<128x128xf32>
    %20 = vector.broadcast %17 : vector<128x1xf32> to vector<128x128xf32>
    %21 = arith.mulf %19, %20 : vector<128x128xf32>
    %c0_11 = arith.constant 0 : index
    %c0_12 = arith.constant 0 : index
    %22 = vector.load %arg3[%c0_11, %c0_12] : memref<1x128xf32, #tpu.memory_space<vmem>>, vector<1x128xf32>
    %23 = vector.broadcast %22 : vector<1x128xf32> to vector<128x128xf32>
    %24 = arith.mulf %21, %23 : vector<128x128xf32>
    %c0_13 = arith.constant 0 : index
    %c0_14 = arith.constant 0 : index
    %25 = vector.load %arg4[%c0_13, %c0_14] : memref<1x128xf32, #tpu.memory_space<vmem>>, vector<1x128xf32>
    %26 = vector.broadcast %25 : vector<1x128xf32> to vector<128x128xf32>
    %27 = arith.addf %24, %26 : vector<128x128xf32>
    %c0_15 = arith.constant 0 : index
    %c0_16 = arith.constant 0 : index
    %28 = vector.load %arg5[%c0_15, %c0_16] : memref<128x128xf32, #tpu.memory_space<vmem>>, vector<128x128xf32>
    tpu.vector_store %arg5[%c0_15, %c0_16], %27 {strides = array<i32>} : memref<128x128xf32, #tpu.memory_space<vmem>>, vector<128x128xf32>,
    return
  }
  func.func @transform_1(%arg0: i32, %arg1: memref<512xi32, #tpu.memory_space<smem>>) -> (i32, i32) {
    %c0_i32 = arith.constant 0 : i32
    %c0_i32_0 = arith.constant 0 : i32
    %c0_i32_1 = arith.constant 0 : i32
    return %c0_i32, %c0_i32_0 : i32, i32
  }
  func.func @transform_2(%arg0: i32, %arg1: memref<512xi32, #tpu.memory_space<smem>>) -> (i32, i32) {
    %c0_i32 = arith.constant 0 : i32
    %c0_i32_0 = arith.constant 0 : i32
    %c0_i32_1 = arith.constant 0 : i32
    return %c0_i32, %c0_i32_0 : i32, i32
  }
  func.func @transform_3(%arg0: i32, %arg1: memref<512xi32, #tpu.memory_space<smem>>) -> (i32, i32) {
    %c0_i32 = arith.constant 0 : i32
    %c0_i32_0 = arith.constant 0 : i32
    return %arg0, %c0_i32 : i32, i32
  }
}

</mosaic_0001>

<llo_original>
// kernel: tpu_custom_call.1
$region0: #{tpu_custom_call.1}
  #allocation0 [shape = 'u32[]', space=smem, size = 0x4, offset = 0x4, fixed_abs, tag = 'smem constant byte address 0x4 - core index']
  #allocation1 [shape = 'u32[144,128]{1,0:T(1,128)}', space=vmem, size = 0x12000, scoped, tag = 'internal scratch']
  #allocation2 [shape = 'f32[128,128]{1,0:T(8,128)}', space=vmem, size = 0x10000, scoped, tag = 'scratch operand']
  #allocation3 [shape = 's32[1]{0}', space=sflag, size = 0x4, scoped, tag = 'scratch operand']
  #allocation4 [shape = 's32[1]{0}', space=sflag, size = 0x4, scoped, tag = 'scoped memory for tpu_custom_call.1']
  #allocation5 [shape = 'u8[2048]{0}', space=smem, size = 0x800, scoped, tag = 'prefetched SMEM operand 0']
  #allocation8 [shape = 's32[]', space=sflag, size = 0x4, offset = 0, fixed_abs, tag = 'sflag constant byte address 0x0 - dummy sync flag']
  #allocation9 [shape = 's32[]', space=sflag, size = 0x4, offset = 0, fixed_abs, tag = 'sflag constant byte address 0x0 - dummy sync flag']
  #allocation10 [shape = 'u32[]', space=smem, size = 0x4, offset = 0x44, fixed_abs, tag = 'smem constant byte address 0x44 - assertion arg 0']
  #allocation11 [shape = 'u32[]', space=smem, size = 0x4, offset = 0x48, fixed_abs, tag = 'smem constant byte address 0x48 - assertion arg 1']
  %s0 = inlined_call_operand.hbm [shape: s32[512], index: 0, kind: input, shape index: {}]
  %s1 = inlined_call_operand.hbm [shape: f32[512,128], index: 1, kind: input, shape index: {}]
  %s2 = inlined_call_operand.vmem [shape: f32[1,128], index: 2, kind: input, shape index: {}]
  %s3 = inlined_call_operand.vmem [shape: f32[1,128], index: 3, kind: input, shape index: {}]
  %s4 = inlined_call_operand.hbm [shape: f32[512,128], index: 4, kind: output, shape index: {}]
  %s5 = sld [smem:[#allocation0]]
  $region59: #{tpu_custom_call.1} parent=0
    _
  %s7 = ssub.s32 1, %s5
  %s8 = scalar_select 0, %s7, %s5
  %10 = dma.hbm_to_smem %s0, 64, [#allocation5], [#allocation4]
  %11 = dma.done [#allocation4], 64
  %12 = sfence
  $region1: #{tpu_custom_call.1} parent=0
    #allocation6 [shape = 'u8[131072]{0}', space=vmem, size = 0x20000, scoped, tag = 'output window, operand 0']
    #allocation7 [shape = 's32[2]{0}', space=sflag, size = 0x8, scoped, tag = 'scoped memory for tpu_custom_call.1']
    %13 = vsyncpa [#allocation7], 0
    %s14 = scalar_lea.sflag [#allocation7], 1
    %15 = vsyncpa %s14, 0
    loop: start=0, step=1, limit=6
    $region2: #{tpu_custom_call.1} parent=1 // loop_pre_header
      _
    $region3: #{tpu_custom_call.1} parent=1 // loop_header
      %s17 = sphi 0, %s21
      %p18 = scmp.ge.s32.totalorder %s17, 6
      %s25 = sphi 0, %s25
      %s27 = sphi 0, %s25
      %s28 = sphi 0, %s27
      %s42 = sphi 0, %s28
      %s46 = sphi 0, %s46
      %s48 = sphi 0, %s46
      %s49 = sphi 0, %s48
      %s63 = sphi 0, %s49
      %s69 = sphi 0, %s71
      %s72 = sphi 0, %s69
      %s73 = sphi 0, %s72
      %s89 = sphi 0, %s73
    $region4: #{tpu_custom_call.1} parent=1 // loop_header_branch
      %20 = sbr.rel (%p18) target = $region8
    $region5: #{tpu_custom_call.1} parent=1 // loop_body
      %s22 = ssub.s32 %s17, 1
      %s23 = ssub.s32 %s17, 2
      %s24 = sadd.s32 %s17, 1
      %s26 = sadd.s32 %s25, 1
      %p29 = scmp.eq.s32.totalorder %s17, 3
      %p30 = scmp.ne.s32.totalorder %s25, %s27
      %p31 = scmp.eq.s32.totalorder %s17, 0
      %p32 = por %p30, %p31
      %p33 = scmp.ne.s32.totalorder %s25, %s27
      %p34 = scmp.eq.s32.totalorder %s22, 3
      %p35 = por %p33, %p34
      %p36 = scmp.ne.s32.totalorder %s27, %s28
      %p37 = scmp.eq.s32.totalorder %s22, 0
      %p38 = por %p36, %p37
      %p39 = scmp.ne.s32.totalorder %s27, %s28
      %p40 = scmp.eq.s32.totalorder %s23, 3
      %p41 = por %p39, %p40
      %p43 = scmp.ne.s32.totalorder %s28, %s42
      %p44 = scmp.eq.s32.totalorder %s23, 0
      %p45 = por %p43, %p44
      %s47 = sadd.s32 %s46, 1
      %p50 = scmp.eq.s32.totalorder %s17, 3
      %p51 = scmp.ne.s32.totalorder %s46, %s48
      %p52 = scmp.eq.s32.totalorder %s17, 0
      %p53 = por %p51, %p52
      %p54 = scmp.ne.s32.totalorder %s46, %s48
      %p55 = scmp.eq.s32.totalorder %s22, 3
      %p56 = por %p54, %p55
      %p57 = scmp.ne.s32.totalorder %s48, %s49
      %p58 = scmp.eq.s32.totalorder %s22, 0
      %p59 = por %p57, %p58
      %p60 = scmp.ne.s32.totalorder %s48, %s49
      %p61 = scmp.eq.s32.totalorder %s23, 3
      %p62 = por %p60, %p61
      %p64 = scmp.ne.s32.totalorder %s49, %s63
      %p65 = scmp.eq.s32.totalorder %s23, 0
      %p66 = por %p64, %p65
      %s67 = ssub.s32 %s17, %s24
      %p68 = scmp.eq.s32.totalorder %s67, 0
      %s70 = sadd.s32 %s69, 1
      %s71 = scalar_select %p68, %s69, %s70
      %p74 = pneg %p68
      %p75 = scmp.eq.s32.totalorder %s17, 3
      %p76 = por %p74, %p75
      %p77 = scmp.ne.s32.totalorder %s69, %s72
      %p78 = scmp.eq.s32.totalorder %s17, 0
      %p79 = por %p77, %p78
      %p80 = scmp.ne.s32.totalorder %s69, %s72
      %p81 = scmp.eq.s32.totalorder %s22, 3
      %p82 = por %p80, %p81
      %p83 = scmp.ne.s32.totalorder %s72, %s73
      %p84 = scmp.eq.s32.totalorder %s22, 0
      %p85 = por %p83, %p84
      %p86 = scmp.ne.s32.totalorder %s72, %s73
      %p87 = scmp.eq.s32.totalorder %s23, 3
      %p88 = por %p86, %p87
      %p90 = scmp.ne.s32.totalorder %s73, %s89
      %p91 = scmp.eq.s32.totalorder %s23, 0
      %p92 = por %p90, %p91
      %p93 = scmp.le.s32.totalorder 1, %s17
      %p94 = scmp.lt.s32.totalorder %s17, 5
      %p95 = pnand %p93, %p94
      %p96 = pneg %p95
      // Predicated region
      $region9: #{tpu_custom_call.1} parent=5 // pred_check
        _
      $region10: #{tpu_custom_call.1} parent=5 // pred_check_branch
        %98 = sbr.rel (%p95) target = $region12
      $region11: #{tpu_custom_call.1} parent=5 // pred_region
        %s99 = ssub.s32 %s17, 1
        // Predicated region
        $region13: #{tpu_custom_call.1} parent=11 // pred_check
          %p100 = pneg %p38
        $region14: #{tpu_custom_call.1} parent=11 // pred_check_branch
          %102 = sbr.rel (%p100) target = $region16
        $region15: #{tpu_custom_call.1} parent=11 // pred_region
          _
        $region16: #{tpu_custom_call.1} parent=11 // pred_fallthru
          _
        // Predicated region
        $region17: #{tpu_custom_call.1} parent=11 // pred_check
          %p103 = pneg %p59
        $region18: #{tpu_custom_call.1} parent=11 // pred_check_branch
          %105 = sbr.rel (%p103) target = $region20
        $region19: #{tpu_custom_call.1} parent=11 // pred_region
          _
        $region20: #{tpu_custom_call.1} parent=11 // pred_fallthru
          _
      $region12: #{tpu_custom_call.1} parent=5 // pred_fallthru
        _
      %p106 = scmp.lt.s32.totalorder %s17, 4
      // Predicated region
      $region21: #{tpu_custom_call.1} parent=5 // pred_check
        %p107 = pneg %p106
      $region22: #{tpu_custom_call.1} parent=5 // pred_check_branch
        %109 = sbr.rel (%p107) target = $region24
      $region23: #{tpu_custom_call.1} parent=5 // pred_region
        _
      $region24: #{tpu_custom_call.1} parent=5 // pred_fallthru
        _
      %p110 = scmp.le.s32.totalorder 1, %s17
      %p111 = scmp.lt.s32.totalorder %s17, 5
      %p112 = pnand %p110, %p111
      %p113 = pneg %p112
      // Predicated region
      $region25: #{tpu_custom_call.1} parent=5 // pred_check
        _
      $region26: #{tpu_custom_call.1} parent=5 // pred_check_branch
        %115 = sbr.rel (%p112) target = $region28
      $region27: #{tpu_custom_call.1} parent=5 // pred_region
        %s116 = ssub.s32 %s17, 1
        %p117 = pneg %p38
        %p118 = pneg %p35
        %p119 = pneg %p59
        %p120 = pneg %p56
        %p121 = pneg %p85
        %p122 = pneg %p82
        %s123 = sand.u32 %s72, 1
        %s124 = scalar_lea.sflag [#allocation7], %s123
        %s125 = sand.u32 %s72, 1
        %s126 = smul.addr %s125, 128
        %s127 = scalar_lea.vmem [#allocation6], %s126
        %s128 = smul.u32 16, %s22
        %s129 = smul.u32 %s22, 128
        loop: start=0, step=1, limit=128
        $region29: #{tpu_custom_call.1} parent=27 // loop_pre_header
          _
        $region30: #{tpu_custom_call.1} parent=27 // loop_header
          %s131 = sphi 0, %s135
          %p132 = scmp.ge.s32.totalorder %s131, 128
        $region31: #{tpu_custom_call.1} parent=27 // loop_header_branch
          %134 = sbr.rel (%p132) target = $region35
        $region32: #{tpu_custom_call.1} parent=27 // loop_body
          %s136 = sadd.s32 %s129, %s131
          %s137 = sld [smem:[#allocation5 + %s136]]
          %s138 = smul.addr %s137, 16
          %s139 = scalar_lea.hbm %s1, %s138
          %s140 = scalar_lea.vmem [#allocation2], %s131
          // Predicated region
          $region36: #{tpu_custom_call.1} parent=32 // pred_check
            _
          $region37: #{tpu_custom_call.1} parent=32 // pred_check_branch
            %142 = sbr.rel target = $region39
          $region38: #{tpu_custom_call.1} parent=32 // pred_region
            %143 = sst [smem:[#allocation10]] [#allocation9]
            %144 = sst [smem:[#allocation11]] [#allocation8]
          $region39: #{tpu_custom_call.1} parent=32 // pred_fallthru
            _
          %146 = shalt.err (0)
          %s148 = sshll.u32 %s140, 4
          %s149 = int_to_ptr.vmem [resolvable:$true] %s148
          %151 = dma.hbm_to_vmem [thread:$0]  %s139, 16, %s149, [#allocation3]
        $region33: #{tpu_custom_call.1} parent=27 // loop_footer
          %s135 = sadd.s32 1, %s131
        $region34: #{tpu_custom_call.1} parent=27 // loop_footer_branch
          %130 = sbr.rel target = $region30
        $region35: #{tpu_custom_call.1} parent=27 // loop_exit
          _
        loop: start=0, step=1, limit=128
        $region40: #{tpu_custom_call.1} parent=27 // loop_pre_header
          _
        $region41: #{tpu_custom_call.1} parent=27 // loop_header
          %s153 = sphi 0, %s157
          %p154 = scmp.ge.s32.totalorder %s153, 128
        $region42: #{tpu_custom_call.1} parent=27 // loop_header_branch
          %156 = sbr.rel (%p154) target = $region46
        $region43: #{tpu_custom_call.1} parent=27 // loop_body
          %s158 = sadd.s32 %s129, %s153
          %s159 = sld [smem:[#allocation5 + %s158]]
          %161 = dma.done [#allocation3], 16
        $region44: #{tpu_custom_call.1} parent=27 // loop_footer
          %s157 = sadd.s32 1, %s153
        $region45: #{tpu_custom_call.1} parent=27 // loop_footer_branch
          %152 = sbr.rel target = $region41
        $region46: #{tpu_custom_call.1} parent=27 // loop_exit
          _
        %v162 = vld [vmem:[#allocation2] sm:$0xff]
        %v163 = vld [vmem:[#allocation2 + $0x8] sm:$0xff]
        %v164 = vld [vmem:[#allocation2 + $0x10] sm:$0xff]
        %v165 = vld [vmem:[#allocation2 + $0x18] sm:$0xff]
        %v166 = vld [vmem:[#allocation2 + $0x20] sm:$0xff]
        %v167 = vld [vmem:[#allocation2 + $0x28] sm:$0xff]
        %v168 = vld [vmem:[#allocation2 + $0x30] sm:$0xff]
        %v169 = vld [vmem:[#allocation2 + $0x38] sm:$0xff]
        %v170 = vld [vmem:[#allocation2 + $0x40] sm:$0xff]
        %v171 = vld [vmem:[#allocation2 + $0x48] sm:$0xff]
        %v172 = vld [vmem:[#allocation2 + $0x50] sm:$0xff]
        %v173 = vld [vmem:[#allocation2 + $0x58] sm:$0xff]
        %v174 = vld [vmem:[#allocation2 + $0x60] sm:$0xff]
        %v175 = vld [vmem:[#allocation2 + $0x68] sm:$0xff]
        %v176 = vld [vmem:[#allocation2 + $0x70] sm:$0xff]
        %v177 = vld [vmem:[#allocation2 + $0x78] sm:$0xff]
        %178 = vadd.xlane.f32.xlu0 %v162
        %v179 = vpop.xlane.xlu0 %178
        %180 = vadd.xlane.f32.xlu0 %v163
        %v181 = vpop.xlane.xlu0 %180
        %182 = vadd.xlane.f32.xlu0 %v164
        %v183 = vpop.xlane.xlu0 %182
        %184 = vadd.xlane.f32.xlu0 %v165
        %v185 = vpop.xlane.xlu0 %184
        %186 = vadd.xlane.f32.xlu0 %v166
        %v187 = vpop.xlane.xlu0 %186
        %188 = vadd.xlane.f32.xlu0 %v167
        %v189 = vpop.xlane.xlu0 %188
        %190 = vadd.xlane.f32.xlu0 %v168
        %v191 = vpop.xlane.xlu0 %190
        %192 = vadd.xlane.f32.xlu0 %v169
        %v193 = vpop.xlane.xlu0 %192
        %194 = vadd.xlane.f32.xlu0 %v170
        %v195 = vpop.xlane.xlu0 %194
        %196 = vadd.xlane.f32.xlu0 %v171
        %v197 = vpop.xlane.xlu0 %196
        %198 = vadd.xlane.f32.xlu0 %v172
        %v199 = vpop.xlane.xlu0 %198
        %200 = vadd.xlane.f32.xlu0 %v173
        %v201 = vpop.xlane.xlu0 %200
        %202 = vadd.xlane.f32.xlu0 %v174
        %v203 = vpop.xlane.xlu0 %202
        %204 = vadd.xlane.f32.xlu0 %v175
        %v205 = vpop.xlane.xlu0 %204
        %206 = vadd.xlane.f32.xlu0 %v176
        %v207 = vpop.xlane.xlu0 %206
        %208 = vadd.xlane.f32.xlu0 %v177
        %v209 = vpop.xlane.xlu0 %208
        %v210 = vmul.f32 %v162, %v162
        %v211 = vmul.f32 %v163, %v163
        %v212 = vmul.f32 %v164, %v164
        %v213 = vmul.f32 %v165, %v165
        %v214 = vmul.f32 %v166, %v166
        %v215 = vmul.f32 %v167, %v167
        %v216 = vmul.f32 %v168, %v168
        %v217 = vmul.f32 %v169, %v169
        %v218 = vmul.f32 %v170, %v170
        %v219 = vmul.f32 %v171, %v171
        %v220 = vmul.f32 %v172, %v172
        %v221 = vmul.f32 %v173, %v173
        %v222 = vmul.f32 %v174, %v174
        %v223 = vmul.f32 %v175, %v175
        %v224 = vmul.f32 %v176, %v176
        %v225 = vmul.f32 %v177, %v177
        %226 = vadd.xlane.f32.xlu0 %v210
        %v227 = vpop.xlane.xlu0 %226
        %228 = vadd.xlane.f32.xlu0 %v211
        %v229 = vpop.xlane.xlu0 %228
        %230 = vadd.xlane.f32.xlu0 %v212
        %v231 = vpop.xlane.xlu0 %230
        %232 = vadd.xlane.f32.xlu0 %v213
        %v233 = vpop.xlane.xlu0 %232
        %234 = vadd.xlane.f32.xlu0 %v214
        %v235 = vpop.xlane.xlu0 %234
        %236 = vadd.xlane.f32.xlu0 %v215
        %v237 = vpop.xlane.xlu0 %236
        %238 = vadd.xlane.f32.xlu0 %v216
        %v239 = vpop.xlane.xlu0 %238
        %240 = vadd.xlane.f32.xlu0 %v217
        %v241 = vpop.xlane.xlu0 %240
        %242 = vadd.xlane.f32.xlu0 %v218
        %v243 = vpop.xlane.xlu0 %242
        %244 = vadd.xlane.f32.xlu0 %v219
        %v245 = vpop.xlane.xlu0 %244
        %246 = vadd.xlane.f32.xlu0 %v220
        %v247 = vpop.xlane.xlu0 %246
        %248 = vadd.xlane.f32.xlu0 %v221
        %v249 = vpop.xlane.xlu0 %248
        %250 = vadd.xlane.f32.xlu0 %v222
        %v251 = vpop.xlane.xlu0 %250
        %252 = vadd.xlane.f32.xlu0 %v223
        %v253 = vpop.xlane.xlu0 %252
        %254 = vadd.xlane.f32.xlu0 %v224
        %v255 = vpop.xlane.xlu0 %254
        %256 = vadd.xlane.f32.xlu0 %v225
        %v257 = vpop.xlane.xlu0 %256
        %v258 = vmul.f32 %v179, 0.0078125
        %v259 = vmul.f32 %v181, 0.0078125
        %v260 = vmul.f32 %v183, 0.0078125
        %v261 = vmul.f32 %v185, 0.0078125
        %v262 = vmul.f32 %v187, 0.0078125
        %v263 = vmul.f32 %v189, 0.0078125
        %v264 = vmul.f32 %v191, 0.0078125
        %v265 = vmul.f32 %v193, 0.0078125
        %v266 = vmul.f32 %v195, 0.0078125
        %v267 = vmul.f32 %v197, 0.0078125
        %v268 = vmul.f32 %v199, 0.0078125
        %v269 = vmul.f32 %v201, 0.0078125
        %v270 = vmul.f32 %v203, 0.0078125
        %v271 = vmul.f32 %v205, 0.0078125
        %v272 = vmul.f32 %v207, 0.0078125
        %v273 = vmul.f32 %v209, 0.0078125
        %v274 = vmul.f32 %v227, 0.0078125
        %v275 = vmul.f32 %v229, 0.0078125
        %v276 = vmul.f32 %v231, 0.0078125
        %v277 = vmul.f32 %v233, 0.0078125
        %v278 = vmul.f32 %v235, 0.0078125
        %v279 = vmul.f32 %v237, 0.0078125
        %v280 = vmul.f32 %v239, 0.0078125
        %v281 = vmul.f32 %v241, 0.0078125
        %v282 = vmul.f32 %v243, 0.0078125
        %v283 = vmul.f32 %v245, 0.0078125
        %v284 = vmul.f32 %v247, 0.0078125
        %v285 = vmul.f32 %v249, 0.0078125
        %v286 = vmul.f32 %v251, 0.0078125
        %v287 = vmul.f32 %v253, 0.0078125
        %v288 = vmul.f32 %v255, 0.0078125
        %v289 = vmul.f32 %v257, 0.0078125
        %v290 = vmul.f32 %v258, %v258
        %v291 = vmul.f32 %v259, %v259
        %v292 = vmul.f32 %v260, %v260
        %v293 = vmul.f32 %v261, %v261
        %v294 = vmul.f32 %v262, %v262
        %v295 = vmul.f32 %v263, %v263
        %v296 = vmul.f32 %v264, %v264
        %v297 = vmul.f32 %v265, %v265
        %v298 = vmul.f32 %v266, %v266
        %v299 = vmul.f32 %v267, %v267
        %v300 = vmul.f32 %v268, %v268
        %v301 = vmul.f32 %v269, %v269
        %v302 = vmul.f32 %v270, %v270
        %v303 = vmul.f32 %v271, %v271
        %v304 = vmul.f32 %v272, %v272
        %v305 = vmul.f32 %v273, %v273
        %v306 = vsub.f32 %v274, %v290
        %v307 = vsub.f32 %v275, %v291
        %v308 = vsub.f32 %v276, %v292
        %v309 = vsub.f32 %v277, %v293
        %v310 = vsub.f32 %v278, %v294
        %v311 = vsub.f32 %v279, %v295
        %v312 = vsub.f32 %v280, %v296
        %v313 = vsub.f32 %v281, %v297
        %v314 = vsub.f32 %v282, %v298
        %v315 = vsub.f32 %v283, %v299
        %v316 = vsub.f32 %v284, %v300
        %v317 = vsub.f32 %v285, %v301
        %v318 = vsub.f32 %v286, %v302
        %v319 = vsub.f32 %v287, %v303
        %v320 = vsub.f32 %v288, %v304
        %v321 = vsub.f32 %v289, %v305
        %v322 = vadd.f32 %v306, 1e-12
        %v323 = vadd.f32 %v307, 1e-12
        %v324 = vadd.f32 %v308, 1e-12
        %v325 = vadd.f32 %v309, 1e-12
        %v326 = vadd.f32 %v310, 1e-12
        %v327 = vadd.f32 %v311, 1e-12
        %v328 = vadd.f32 %v312, 1e-12
        %v329 = vadd.f32 %v313, 1e-12
        %v330 = vadd.f32 %v314, 1e-12
        %v331 = vadd.f32 %v315, 1e-12
        %v332 = vadd.f32 %v316, 1e-12
        %v333 = vadd.f32 %v317, 1e-12
        %v334 = vadd.f32 %v318, 1e-12
        %v335 = vadd.f32 %v319, 1e-12
        %v336 = vadd.f32 %v320, 1e-12
        %v337 = vadd.f32 %v321, 1e-12
        %v338 = vrsqrt.pop %v322
        %v339 = vrsqrt.pop %v323
        %v340 = vrsqrt.pop %v324
        %v341 = vrsqrt.pop %v325
        %v342 = vrsqrt.pop %v326
        %v343 = vrsqrt.pop %v327
        %v344 = vrsqrt.pop %v328
        %v345 = vrsqrt.pop %v329
        %v346 = vrsqrt.pop %v330
        %v347 = vrsqrt.pop %v331
        %v348 = vrsqrt.pop %v332
        %v349 = vrsqrt.pop %v333
        %v350 = vrsqrt.pop %v334
        %v351 = vrsqrt.pop %v335
        %v352 = vrsqrt.pop %v336
        %v353 = vrsqrt.pop %v337
        %v354 = vsub.f32 %v162, %v258
        %v355 = vsub.f32 %v163, %v259
        %v356 = vsub.f32 %v164, %v260
        %v357 = vsub.f32 %v165, %v261
        %v358 = vsub.f32 %v166, %v262
        %v359 = vsub.f32 %v167, %v263
        %v360 = vsub.f32 %v168, %v264
        %v361 = vsub.f32 %v169, %v265
        %v362 = vsub.f32 %v170, %v266
        %v363 = vsub.f32 %v171, %v267
        %v364 = vsub.f32 %v172, %v268
        %v365 = vsub.f32 %v173, %v269
        %v366 = vsub.f32 %v174, %v270
        %v367 = vsub.f32 %v175, %v271
        %v368 = vsub.f32 %v176, %v272
        %v369 = vsub.f32 %v177, %v273
        %v370 = vmul.f32 %v354, %v338
        %v371 = vmul.f32 %v355, %v339
        %v372 = vmul.f32 %v356, %v340
        %v373 = vmul.f32 %v357, %v341
        %v374 = vmul.f32 %v358, %v342
        %v375 = vmul.f32 %v359, %v343
        %v376 = vmul.f32 %v360, %v344
        %v377 = vmul.f32 %v361, %v345
        %v378 = vmul.f32 %v362, %v346
        %v379 = vmul.f32 %v363, %v347
        %v380 = vmul.f32 %v364, %v348
        %v381 = vmul.f32 %v365, %v349
        %v382 = vmul.f32 %v366, %v350
        %v383 = vmul.f32 %v367, %v351
        %v384 = vmul.f32 %v368, %v352
        %v385 = vmul.f32 %v369, %v353
        %v386 = vld [vmem:[%s2] sm:$0x1]
        %v388 = vlaneseq
        %v389 = vshrl.u32 %v388, 7
        %v390 = vsub.s32 0, %v389
        %v391 = vrot.slane %v386, %v390
        %v393 = vmul.f32 %v370, %v391
        %v394 = vmul.f32 %v371, %v391
        %v395 = vmul.f32 %v372, %v391
        %v396 = vmul.f32 %v373, %v391
        %v397 = vmul.f32 %v374, %v391
        %v398 = vmul.f32 %v375, %v391
        %v399 = vmul.f32 %v376, %v391
        %v400 = vmul.f32 %v377, %v391
        %v401 = vmul.f32 %v378, %v391
        %v402 = vmul.f32 %v379, %v391
        %v403 = vmul.f32 %v380, %v391
        %v404 = vmul.f32 %v381, %v391
        %v405 = vmul.f32 %v382, %v391
        %v406 = vmul.f32 %v383, %v391
        %v407 = vmul.f32 %v384, %v391
        %v408 = vmul.f32 %v385, %v391
        %v409 = vld [vmem:[%s3] sm:$0x1]
        %v411 = vlaneseq
        %v412 = vshrl.u32 %v411, 7
        %v413 = vsub.s32 0, %v412
        %v414 = vrot.slane %v409, %v413
        %v416 = vadd.f32 %v393, %v414
        %v417 = vadd.f32 %v394, %v414
        %v418 = vadd.f32 %v395, %v414
        %v419 = vadd.f32 %v396, %v414
        %v420 = vadd.f32 %v397, %v414
        %v421 = vadd.f32 %v398, %v414
        %v422 = vadd.f32 %v399, %v414
        %v423 = vadd.f32 %v400, %v414
        %v424 = vadd.f32 %v401, %v414
        %v425 = vadd.f32 %v402, %v414
        %v426 = vadd.f32 %v403, %v414
        %v427 = vadd.f32 %v404, %v414
        %v428 = vadd.f32 %v405, %v414
        %v429 = vadd.f32 %v406, %v414
        %v430 = vadd.f32 %v407, %v414
        %v431 = vadd.f32 %v408, %v414
        %432 = vst [vmem:[%s127] sm:$0xff] %v416
        %433 = vst [vmem:[%s127 + $0x8] sm:$0xff] %v417
        %434 = vst [vmem:[%s127 + $0x10] sm:$0xff] %v418
        %435 = vst [vmem:[%s127 + $0x18] sm:$0xff] %v419
        %436 = vst [vmem:[%s127 + $0x20] sm:$0xff] %v420
        %437 = vst [vmem:[%s127 + $0x28] sm:$0xff] %v421
        %438 = vst [vmem:[%s127 + $0x30] sm:$0xff] %v422
        %439 = vst [vmem:[%s127 + $0x38] sm:$0xff] %v423
        %440 = vst [vmem:[%s127 + $0x40] sm:$0xff] %v424
        %441 = vst [vmem:[%s127 + $0x48] sm:$0xff] %v425
        %442 = vst [vmem:[%s127 + $0x50] sm:$0xff] %v426
        %443 = vst [vmem:[%s127 + $0x58] sm:$0xff] %v427
        %444 = vst [vmem:[%s127 + $0x60] sm:$0xff] %v428
        %445 = vst [vmem:[%s127 + $0x68] sm:$0xff] %v429
        %446 = vst [vmem:[%s127 + $0x70] sm:$0xff] %v430
        %447 = vst [vmem:[%s127 + $0x78] sm:$0xff] %v431
        %s448 = sand.u32 %s72, 1
        %s449 = scalar_lea.sflag [#allocation7], %s448
        %s450 = sand.u32 %s72, 1
        %s451 = smul.addr %s450, 128
        %s452 = scalar_lea.vmem [#allocation6], %s451
        // Predicated region
        $region47: #{tpu_custom_call.1} parent=27 // pred_check
          %p453 = pneg %p82
        $region48: #{tpu_custom_call.1} parent=27 // pred_check_branch
          %455 = sbr.rel (%p453) target = $region50
        $region49: #{tpu_custom_call.1} parent=27 // pred_region
          %s456 = smul.u32 16, %s22
          %s458 = ssub.s32 2048, 2048
          %459 = vsyncadd %s449, %s458
          %s460 = smul.addr %s456, 128
          %s461 = scalar_lea.hbm %s4, %s460
          %s462 = sshll.u32 %s452, 4
          %s463 = int_to_ptr.vmem [resolvable:$true] %s462
          %468 = dma.vmem_to_hbm [thread:$0]  %s463, 2048, %s461, %s449, 128, 128, 8
        $region50: #{tpu_custom_call.1} parent=27 // pred_fallthru
          _
      $region28: #{tpu_custom_call.1} parent=5 // pred_fallthru
        _
      %p469 = scmp.le.s32.totalorder 2, %s17
      // Predicated region
      $region51: #{tpu_custom_call.1} parent=5 // pred_check
        %p470 = pneg %p469
      $region52: #{tpu_custom_call.1} parent=5 // pred_check_branch
        %472 = sbr.rel (%p470) target = $region54
      $region53: #{tpu_custom_call.1} parent=5 // pred_region
        %s473 = ssub.s32 %s17, 2
        // Predicated region
        $region55: #{tpu_custom_call.1} parent=53 // pred_check
          %p474 = pneg %p88
        $region56: #{tpu_custom_call.1} parent=53 // pred_check_branch
          %476 = sbr.rel (%p474) target = $region58
        $region57: #{tpu_custom_call.1} parent=53 // pred_region
          %s477 = sand.u32 %s73, 1
          %s478 = scalar_lea.sflag [#allocation7], %s477
          %s479 = sand.u32 %s73, 1
          %s480 = smul.addr %s479, 128
          %s481 = scalar_lea.vmem [#allocation6], %s480
          %482 = dma.done %s478, 2048
        $region58: #{tpu_custom_call.1} parent=53 // pred_fallthru
          _
      $region54: #{tpu_custom_call.1} parent=5 // pred_fallthru
        _
    $region6: #{tpu_custom_call.1} parent=1 // loop_footer
      %s21 = sadd.s32 1, %s17
    $region7: #{tpu_custom_call.1} parent=1 // loop_footer_branch
      %16 = sbr.rel target = $region3
    $region8: #{tpu_custom_call.1} parent=1 // loop_exit
      _
    %483 = vsyncpa [#allocation7], 1
    %s484 = scalar_lea.sflag [#allocation7], 1
    %485 = vsyncpa %s484, 1
  %486 = vsyncmov [#allocation3]
  %s487 = vpop.sfrf %486
  %p488 = scmp.eq.s32.totalorder %s487, 0
  %p489 = pneg %p488
  %491 = shalt.err (%p489)

</llo_original>
